<compile_context>
chip_gen: v6e
topology: v6e:2x2x1
jax: 0.10.0
libtpu: 0.0.40
codegen_flags: <defaults>
</compile_context>

<pallas_src>
import functools

import jax
import jax.numpy as jnp
from jax.experimental import pallas as pl
from jax.experimental.pallas import tpu as pltpu


def _cdiv(a, b):
    return (a + b - 1) // b


def _round_up(x, m):
    return _cdiv(x, m) * m


def actor_critic_kernel(x_ref, w1_ref, b1_ref, w2_ref, b2_ref, wh_ref, bh_ref,
                        wv_ref, bv_ref, policy_ref, value_ref,
                        *, num_actions, num_obs):
    x = x_ref[...]                                       # (tb, num_obs) f32
    cdt = w2_ref.dtype                                   # MXU compute dtype

    # ---- layer 1: Linear(num_obs, 128) + ReLU -------------------------------
    if num_obs <= 16:
        # K is tiny -> a handful of VPU broadcast-FMAs; keep the MXU free for
        # the 128x128 layers.
        w1 = w1_ref[...]
        h = b1_ref[...]
        for k in range(num_obs):
            h = h + x[:, k:k + 1] * w1[k:k + 1, :]
    else:
        h = jnp.dot(x.astype(cdt), w1_ref[...].astype(cdt),
                    preferred_element_type=jnp.float32) + b1_ref[...]
    h = jnp.maximum(h, 0.0)

    # ---- layer 2: Linear(128, 128) + ReLU (MXU, cdt operands / f32 acc) -----
    h = jnp.dot(h.astype(cdt), w2_ref[...],
                preferred_element_type=jnp.float32) + b2_ref[...]
    h = jnp.maximum(h, 0.0)                              # (tb, 128) f32 trunk

    # ---- policy head + softmax ----------------------------------------------
    # wh: [128, 128], columns [0, A) are the policy weights, the rest are 0.
    # bh: -1e30 baked into the padding lanes, so padded logits vanish in the
    # softmax (exp underflows to 0) with no per-step iota/where masking.
    logits = jnp.dot(h.astype(cdt), wh_ref[...],
                     preferred_element_type=jnp.float32) + bh_ref[...]
    m = jnp.max(logits, axis=1, keepdims=True)
    e = jnp.exp(logits - m)
    denom = jnp.sum(e, axis=1, keepdims=True)
    inv = pl.reciprocal(denom, approx=True)              # EUP slot
    inv = inv * (2.0 - denom * inv)                      # one Newton step -> near-exact
    probs = e * inv
    policy_ref[...] = probs[:, :num_actions]             # narrow (tb, A) store

    # ---- value head: N == 1 -> VPU mul + XLU lane reduce, kept in f32 -------
    value_ref[...] = jnp.sum(h * wv_ref[...], axis=1, keepdims=True) + bv_ref[...]


def prepare_params(params, compute_dtype=jnp.bfloat16):
    """One-time parameter prep (hoisted out of the forward hot path).

    - policy head padded to a lane-dense 128-wide matmul; padding lanes get a
      baked-in -1e30 bias so the kernel softmax needs no masking.
    - MXU weights (w2, wh) cast once to `compute_dtype` (bf16 by default:
      native MXU passes on v5e, half the weight DMA/VMEM; pass jnp.float32 for
      bit-faithful numerics).
    - value head kept as an f32 row for the in-kernel VPU/XLU dot.
    """
    (w1, b1, w2, b2, wp, bp, wv, bv) = params
    H, A = wp.shape
    head_pad = _round_up(A, 128)
    wh = jnp.zeros((H, head_pad), compute_dtype).at[:, :A].set(wp.astype(compute_dtype))
    bh = jnp.full((1, head_pad), -1e30, jnp.float32).at[:, :A].set(bp.astype(jnp.float32))
    return dict(
        num_actions=A,
        w1=w1.astype(jnp.float32), b1=b1.astype(jnp.float32),
        w2=w2.astype(compute_dtype), b2=b2.astype(jnp.float32),
        wh=wh, bh=bh,
        wv=wv.reshape(1, H).astype(jnp.float32),
        bv=bv.reshape(1, 1).astype(jnp.float32),
    )


# f32 VMEM bytes per batch row (lane-padded to 128):
#   x tile (2 bufs) + policy tile (2 bufs) + value tile (2 bufs) + ~6 live temps
_VMEM_BYTES_PER_ROW = (2 + 2 + 2 + 6) * 128 * 4


def _choose_batch_tile(B, block_b, vmem_limit_bytes):
    # Cap the tile so per-row VMEM (+ ~1 MiB of resident weights) fits budget.
    max_rows = max(8, ((vmem_limit_bytes - (1 << 20)) // _VMEM_BYTES_PER_ROW) // 8 * 8)
    block_b = min(block_b, max_rows)
    # >=2 grid steps (v7x has 2 TensorCores), even step count, <8 rows padding
    # per tile for awkward B.
    n_steps = max(2, _cdiv(B, block_b))
    n_steps += n_steps % 2
    tb = max(8, _round_up(_cdiv(B, n_steps), 8))
    grid_b = _cdiv(B, tb)
    return tb, grid_b


def actor_critic_forward(x, prepared, *, block_b=2048,
                         vmem_limit_bytes=48 * 1024 * 1024):
    B, num_obs = x.shape
    A = prepared["num_actions"]
    w1, b1 = prepared["w1"], prepared["b1"]
    w2, b2 = prepared["w2"], prepared["b2"]
    wh, bh = prepared["wh"], prepared["bh"]
    wv, bv = prepared["wv"], prepared["bv"]

    tb, grid_b = _choose_batch_tile(B, block_b, vmem_limit_bytes)
    b_pad = tb * grid_b
    if b_pad != B:
        x = jnp.pad(x, ((0, b_pad - B), (0, 0)))

    # constant index_map -> each weight is DMA'd once and stays VMEM-resident
    # (optionally single-bufferable via pipeline_mode=pl.Buffered(1); left at
    # the default since the ~100 KB double-buffer is not the binding constraint)
    resident = lambda i: (0, 0)
    kernel = functools.partial(actor_critic_kernel, num_actions=A, num_obs=num_obs)

    policy, value = pl.pallas_call(
        kernel,
        out_shape=(jax.ShapeDtypeStruct((b_pad, A), jnp.float32),
                   jax.ShapeDtypeStruct((b_pad, 1), jnp.float32)),
        grid=(grid_b,),
        in_specs=[
            pl.BlockSpec((tb, num_obs), lambda i: (i, 0)),
            pl.BlockSpec(w1.shape, resident),
            pl.BlockSpec(b1.shape, resident),
            pl.BlockSpec(w2.shape, resident),
            pl.BlockSpec(b2.shape, resident),
            pl.BlockSpec(wh.shape, resident),
            pl.BlockSpec(bh.shape, resident),
            pl.BlockSpec(wv.shape, resident),
            pl.BlockSpec(bv.shape, resident),
        ],
        out_specs=(pl.BlockSpec((tb, A), lambda i: (i, 0)),
                   pl.BlockSpec((tb, 1), lambda i: (i, 0))),
        compiler_params=pltpu.CompilerParams(
            dimension_semantics=("parallel",),
            vmem_limit_bytes=vmem_limit_bytes,
        ),
    )(x, w1, b1, w2, b2, wh, bh, wv, bv)

    if b_pad != B:
        policy, value = policy[:B], value[:B]
    return policy, value


def init_params(key, num_obs, num_actions, hidden=128):
    """Deterministic init mimicking PyTorch's default Linear init
    (U[-1/sqrt(fan_in), +1/sqrt(fan_in)]); weights stored as [in, out]."""
    def linear(k, fan_in, fan_out):
        k_w, k_b = jax.random.split(k)
        bound = 1.0 / jnp.sqrt(fan_in)
        w = jax.random.uniform(k_w, (fan_in, fan_out), jnp.float32, -bound, bound)
        b = jax.random.uniform(k_b, (1, fan_out), jnp.float32, -bound, bound)
        return w, b

    k1, k2, k3, k4 = jax.random.split(key, 4)
    w1, b1 = linear(k1, num_obs, hidden)
    w2, b2 = linear(k2, hidden, hidden)
    wp, bp = linear(k3, hidden, num_actions)
    wv, bv = linear(k4, hidden, 1)
    return (w1, b1, w2, b2, wp, bp, wv, bv)


def reference_forward(x, params):
    (w1, b1, w2, b2, wp, bp, wv, bv) = params
    h = jnp.maximum(x @ w1 + b1, 0.0)
    h = jnp.maximum(h @ w2 + b2, 0.0)
    probs = jax.nn.softmax(h @ wp + bp, axis=1)
    value = h @ wv + bv
    return probs, value


def _check(B, num_obs, num_actions, key, compute_dtype, tol):
    k_x, k_p = jax.random.split(key)
    x = jax.random.normal(k_x, (B, num_obs), jnp.float32)
    params = init_params(k_p, num_obs, num_actions)
    prepared = prepare_params(params, compute_dtype=compute_dtype)

    policy, value = actor_critic_forward(x, prepared)
    jax.block_until_ready((policy, value))

    ref_policy, ref_value = reference_forward(x, params)
    assert policy.shape == (B, num_actions) and value.shape == (B, 1)
    assert jnp.allclose(policy, ref_policy, atol=tol, rtol=tol), "policy mismatch"
    assert jnp.allclose(value, ref_value, atol=tol, rtol=tol), "value mismatch"
    assert jnp.allclose(jnp.sum(policy, axis=1), 1.0, atol=1e-3), "simplex violated"


if __name__ == "__main__":
    key = jax.random.PRNGKey(0)
    k1, k2, k3 = jax.random.split(key, 3)

    # f32 compute (bit-faithful to the PyTorch module), tiny single-tile batch
    _check(B=8, num_obs=4, num_actions=4, key=k1,
           compute_dtype=jnp.float32, tol=1e-4)
    # bf16 MXU operands (v5e-oriented fast path), multi-tile grid + batch padding
    _check(B=300, num_obs=4, num_actions=4, key=k2,
           compute_dtype=jnp.bfloat16, tol=5e-2)
    # f32, multi-tile, padding-free split, different action count
    _check(B=304, num_obs=4, num_actions=2, key=k3,
           compute_dtype=jnp.float32, tol=1e-4)

    print("KERNEL_OK")
</pallas_src>

<mosaic_0001>
module attributes {stable_mosaic.version = 11 : i64} {
  func.func @actor_critic_kernel(%arg0: i32, %arg1: memref<8x4xf32, #tpu.memory_space<vmem>>, %arg2: memref<4x128xf32, #tpu.memory_space<vmem>>, %arg3: memref<1x128xf32, #tpu.memory_space<vmem>>, %arg4: memref<128x128xf32, #tpu.memory_space<vmem>>, %arg5: memref<1x128xf32, #tpu.memory_space<vmem>>, %arg6: memref<128x128xf32, #tpu.memory_space<vmem>>, %arg7: memref<1x128xf32, #tpu.memory_space<vmem>>, %arg8: memref<1x128xf32, #tpu.memory_space<vmem>>, %arg9: memref<1x1xf32, #tpu.memory_space<vmem>>, %arg10: memref<8x4xf32, #tpu.memory_space<vmem>>, %arg11: memref<8x1xf32, #tpu.memory_space<vmem>>) attributes {dimension_semantics = [#tpu.dimension_semantics<parallel>], iteration_bounds = array<i64: 1>, scalar_prefetch = 0 : i64, scratch_operands = 0 : i64, tpu.core_type = #tpu.core_type<tc>, window_params = [{transform_indices = @transform_0, window_bounds = array<i64: 8, 4>}, {pipeline_mode = #tpu.pipeline_mode<synchronous>, transform_indices = @transform_1, window_bounds = array<i64: 4, 128>}, {pipeline_mode = #tpu.pipeline_mode<synchronous>, transform_indices = @transform_2, window_bounds = array<i64: 1, 128>}, {pipeline_mode = #tpu.pipeline_mode<synchronous>, transform_indices = @transform_3, window_bounds = array<i64: 128, 128>}, {pipeline_mode = #tpu.pipeline_mode<synchronous>, transform_indices = @transform_4, window_bounds = array<i64: 1, 128>}, {pipeline_mode = #tpu.pipeline_mode<synchronous>, transform_indices = @transform_5, window_bounds = array<i64: 128, 128>}, {pipeline_mode = #tpu.pipeline_mode<synchronous>, transform_indices = @transform_6, window_bounds = array<i64: 1, 128>}, {pipeline_mode = #tpu.pipeline_mode<synchronous>, transform_indices = @transform_7, window_bounds = array<i64: 1, 128>}, {pipeline_mode = #tpu.pipeline_mode<synchronous>, transform_indices = @transform_8, window_bounds = array<i64: 1, 1>}, {transform_indices = @transform_9, window_bounds = array<i64: 8, 4>}, {transform_indices = @transform_10, window_bounds = array<i64: 8, 1>}]} {
    %c0 = arith.constant 0 : index
    %c0_0 = arith.constant 0 : index
    %0 = vector.load %arg1[%c0, %c0_0] : memref<8x4xf32, #tpu.memory_space<vmem>>, vector<8x4xf32>
    %c0_1 = arith.constant 0 : index
    %c0_2 = arith.constant 0 : index
    %1 = vector.load %arg2[%c0_1, %c0_2] : memref<4x128xf32, #tpu.memory_space<vmem>>, vector<4x128xf32>
    %c0_3 = arith.constant 0 : index
    %c0_4 = arith.constant 0 : index
    %2 = vector.load %arg3[%c0_3, %c0_4] : memref<1x128xf32, #tpu.memory_space<vmem>>, vector<1x128xf32>
    %3 = vector.extract_strided_slice %0 {offsets = [0, 0], sizes = [8, 1], strides = [1, 1]} : vector<8x4xf32> to vector<8x1xf32>
    %4 = vector.extract_strided_slice %1 {offsets = [0, 0], sizes = [1, 128], strides = [1, 1]} : vector<4x128xf32> to vector<1x128xf32>
    %5 = vector.broadcast %3 : vector<8x1xf32> to vector<8x128xf32>
    %6 = vector.broadcast %4 : vector<1x128xf32> to vector<8x128xf32>
    %7 = arith.mulf %5, %6 : vector<8x128xf32>
    %8 = vector.broadcast %2 : vector<1x128xf32> to vector<8x128xf32>
    %9 = arith.addf %8, %7 : vector<8x128xf32>
    %10 = vector.extract_strided_slice %0 {offsets = [0, 1], sizes = [8, 1], strides = [1, 1]} : vector<8x4xf32> to vector<8x1xf32>
    %11 = vector.extract_strided_slice %1 {offsets = [1, 0], sizes = [1, 128], strides = [1, 1]} : vector<4x128xf32> to vector<1x128xf32>
    %12 = vector.broadcast %10 : vector<8x1xf32> to vector<8x128xf32>
    %13 = vector.broadcast %11 : vector<1x128xf32> to vector<8x128xf32>
    %14 = arith.mulf %12, %13 : vector<8x128xf32>
    %15 = arith.addf %9, %14 : vector<8x128xf32>
    %16 = vector.extract_strided_slice %0 {offsets = [0, 2], sizes = [8, 1], strides = [1, 1]} : vector<8x4xf32> to vector<8x1xf32>
    %17 = vector.extract_strided_slice %1 {offsets = [2, 0], sizes = [1, 128], strides = [1, 1]} : vector<4x128xf32> to vector<1x128xf32>
    %18 = vector.broadcast %16 : vector<8x1xf32> to vector<8x128xf32>
    %19 = vector.broadcast %17 : vector<1x128xf32> to vector<8x128xf32>
    %20 = arith.mulf %18, %19 : vector<8x128xf32>
    %21 = arith.addf %15, %20 : vector<8x128xf32>
    %22 = vector.extract_strided_slice %0 {offsets = [0, 3], sizes = [8, 1], strides = [1, 1]} : vector<8x4xf32> to vector<8x1xf32>
    %23 = vector.extract_strided_slice %1 {offsets = [3, 0], sizes = [1, 128], strides = [1, 1]} : vector<4x128xf32> to vector<1x128xf32>
    %24 = vector.broadcast %22 : vector<8x1xf32> to vector<8x128xf32>
    %25 = vector.broadcast %23 : vector<1x128xf32> to vector<8x128xf32>
    %26 = arith.mulf %24, %25 : vector<8x128xf32>
    %27 = arith.addf %21, %26 : vector<8x128xf32>
    %cst = arith.constant 0.000000e+00 : f32
    %28 = vector.broadcast %cst : f32 to vector<8x128xf32>
    %29 = arith.maximumf %27, %28 : vector<8x128xf32>
    %c0_5 = arith.constant 0 : index
    %c0_6 = arith.constant 0 : index
    %30 = vector.load %arg4[%c0_5, %c0_6] : memref<128x128xf32, #tpu.memory_space<vmem>>, vector<128x128xf32>
    %cst_7 = arith.constant dense<0.000000e+00> : vector<8x128xf32>
    %31 = tpu.matmul %29, %30, %cst_7 {dimension_numbers = #tpu.dot_dimension_numbers<[1], [0], [0], [1], [0, 0, 1, 1], [], []>} : vector<8x128xf32>, vector<128x128xf32>, vector<8x128xf32> -> vector<8x128xf32>
    %c0_8 = arith.constant 0 : index
    %c0_9 = arith.constant 0 : index
    %32 = vector.load %arg5[%c0_8, %c0_9] : memref<1x128xf32, #tpu.memory_space<vmem>>, vector<1x128xf32>
    %33 = vector.broadcast %32 : vector<1x128xf32> to vector<8x128xf32>
    %34 = arith.addf %31, %33 : vector<8x128xf32>
    %cst_10 = arith.constant 0.000000e+00 : f32
    %35 = vector.broadcast %cst_10 : f32 to vector<8x128xf32>
    %36 = arith.maximumf %34, %35 : vector<8x128xf32>
    %c0_11 = arith.constant 0 : index
    %c0_12 = arith.constant 0 : index
    %37 = vector.load %arg6[%c0_11, %c0_12] : memref<128x128xf32, #tpu.memory_space<vmem>>, vector<128x128xf32>
    %cst_13 = arith.constant dense<0.000000e+00> : vector<8x128xf32>
    %38 = tpu.matmul %36, %37, %cst_13 {dimension_numbers = #tpu.dot_dimension_numbers<[1], [0], [0], [1], [0, 0, 1, 1], [], []>} : vector<8x128xf32>, vector<128x128xf32>, vector<8x128xf32> -> vector<8x128xf32>
    %c0_14 = arith.constant 0 : index
    %c0_15 = arith.constant 0 : index
    %39 = vector.load %arg7[%c0_14, %c0_15] : memref<1x128xf32, #tpu.memory_space<vmem>>, vector<1x128xf32>
    %40 = vector.broadcast %39 : vector<1x128xf32> to vector<8x128xf32>
    %41 = arith.addf %38, %40 : vector<8x128xf32>
    %cst_16 = arith.constant dense<0xFF800000> : vector<8xf32>
    %42 = vector.multi_reduction <maximumf>, %41, %cst_16 [1] : vector<8x128xf32> to vector<8xf32>
    %43 = vector.shape_cast %42 : vector<8xf32> to vector<8x1xf32>
    %44 = vector.broadcast %43 : vector<8x1xf32> to vector<8x128xf32>
    %45 = arith.subf %41, %44 : vector<8x128xf32>
    %46 = math.exp %45 : vector<8x128xf32>
    %cst_17 = arith.constant dense<0.000000e+00> : vector<8xf32>
    %47 = vector.multi_reduction <add>, %46, %cst_17 [1] : vector<8x128xf32> to vector<8xf32>
    %48 = vector.shape_cast %47 : vector<8xf32> to vector<8x1xf32>
    %49 = tpu.reciprocal %48 {approx = true} : vector<8x1xf32> -> vector<8x1xf32>
    %50 = arith.mulf %48, %49 : vector<8x1xf32>
    %cst_18 = arith.constant 2.000000e+00 : f32
    %51 = vector.broadcast %cst_18 : f32 to vector<8x1xf32>
    %52 = arith.subf %51, %50 : vector<8x1xf32>
    %53 = arith.mulf %49, %52 : vector<8x1xf32>
    %54 = vector.broadcast %53 : vector<8x1xf32> to vector<8x128xf32>
    %55 = arith.mulf %46, %54 : vector<8x128xf32>
    %56 = vector.extract_strided_slice %55 {offsets = [0, 0], sizes = [8, 4], strides = [1, 1]} : vector<8x128xf32> to vector<8x4xf32>
    %c0_19 = arith.constant 0 : index
    %c0_20 = arith.constant 0 : index
    %57 = vector.load %arg10[%c0_19, %c0_20] : memref<8x4xf32, #tpu.memory_space<vmem>>, vector<8x4xf32>
    tpu.vector_store %arg10[%c0_19, %c0_20], %56 {strides = array<i32>} : memref<8x4xf32, #tpu.memory_space<vmem>>, vector<8x4xf32>,
    %c0_21 = arith.constant 0 : index
    %c0_22 = arith.constant 0 : index
    %58 = vector.load %arg8[%c0_21, %c0_22] : memref<1x128xf32, #tpu.memory_space<vmem>>, vector<1x128xf32>
    %59 = vector.broadcast %58 : vector<1x128xf32> to vector<8x128xf32>
    %60 = arith.mulf %36, %59 : vector<8x128xf32>
    %cst_23 = arith.constant dense<0.000000e+00> : vector<8xf32>
    %61 = vector.multi_reduction <add>, %60, %cst_23 [1] : vector<8x128xf32> to vector<8xf32>
    %62 = vector.shape_cast %61 : vector<8xf32> to vector<8x1xf32>
    %c0_24 = arith.constant 0 : index
    %c0_25 = arith.constant 0 : index
    %63 = vector.load %arg9[%c0_24, %c0_25] : memref<1x1xf32, #tpu.memory_space<vmem>>, vector<1x1xf32>
    %64 = vector.broadcast %63 : vector<1x1xf32> to vector<8x1xf32>
    %65 = arith.addf %62, %64 : vector<8x1xf32>
    %c0_26 = arith.constant 0 : index
    %c0_27 = arith.constant 0 : index
    %66 = vector.load %arg11[%c0_26, %c0_27] : memref<8x1xf32, #tpu.memory_space<vmem>>, vector<8x1xf32>
    tpu.vector_store %arg11[%c0_26, %c0_27], %65 {strides = array<i32>} : memref<8x1xf32, #tpu.memory_space<vmem>>, vector<8x1xf32>,
    return
  }
  func.func @transform_0(%arg0: i32) -> (i32, i32) {
    %c0_i32 = arith.constant 0 : i32
    %c0_i32_0 = arith.constant 0 : i32
    return %arg0, %c0_i32 : i32, i32
  }
  func.func @transform_1(%arg0: i32) -> (i32, i32) {
    %c0_i32 = arith.constant 0 : i32
    %c0_i32_0 = arith.constant 0 : i32
    %c0_i32_1 = arith.constant 0 : i32
    return %c0_i32, %c0_i32_0 : i32, i32
  }
  func.func @transform_2(%arg0: i32) -> (i32, i32) {
    %c0_i32 = arith.constant 0 : i32
    %c0_i32_0 = arith.constant 0 : i32
    %c0_i32_1 = arith.constant 0 : i32
    return %c0_i32, %c0_i32_0 : i32, i32
  }
  func.func @transform_3(%arg0: i32) -> (i32, i32) {
    %c0_i32 = arith.constant 0 : i32
    %c0_i32_0 = arith.constant 0 : i32
    %c0_i32_1 = arith.constant 0 : i32
    return %c0_i32, %c0_i32_0 : i32, i32
  }
  func.func @transform_4(%arg0: i32) -> (i32, i32) {
    %c0_i32 = arith.constant 0 : i32
    %c0_i32_0 = arith.constant 0 : i32
    %c0_i32_1 = arith.constant 0 : i32
    return %c0_i32, %c0_i32_0 : i32, i32
  }
  func.func @transform_5(%arg0: i32) -> (i32, i32) {
    %c0_i32 = arith.constant 0 : i32
    %c0_i32_0 = arith.constant 0 : i32
    %c0_i32_1 = arith.constant 0 : i32
    return %c0_i32, %c0_i32_0 : i32, i32
  }
  func.func @transform_6(%arg0: i32) -> (i32, i32) {
    %c0_i32 = arith.constant 0 : i32
    %c0_i32_0 = arith.constant 0 : i32
    %c0_i32_1 = arith.constant 0 : i32
    return %c0_i32, %c0_i32_0 : i32, i32
  }
  func.func @transform_7(%arg0: i32) -> (i32, i32) {
    %c0_i32 = arith.constant 0 : i32
    %c0_i32_0 = arith.constant 0 : i32
    %c0_i32_1 = arith.constant 0 : i32
    return %c0_i32, %c0_i32_0 : i32, i32
  }
  func.func @transform_8(%arg0: i32) -> (i32, i32) {
    %c0_i32 = arith.constant 0 : i32
    %c0_i32_0 = arith.constant 0 : i32
    %c0_i32_1 = arith.constant 0 : i32
    return %c0_i32, %c0_i32_0 : i32, i32
  }
  func.func @transform_9(%arg0: i32) -> (i32, i32) {
    %c0_i32 = arith.constant 0 : i32
    %c0_i32_0 = arith.constant 0 : i32
    return %arg0, %c0_i32 : i32, i32
  }
  func.func @transform_10(%arg0: i32) -> (i32, i32) {
    %c0_i32 = arith.constant 0 : i32
    %c0_i32_0 = arith.constant 0 : i32
    return %arg0, %c0_i32 : i32, i32
  }
}

</mosaic_0001>

<llo_original>
// kernel: tpu_custom_call.1
$region0: #{tpu_custom_call.1}
  #allocation0 [shape = 'u32[]', space=smem, size = 0x4, offset = 0x4, fixed_abs, tag = 'smem constant byte address 0x4 - core index']
  #allocation1 [shape = 'u32[144,128]{1,0:T(1,128)}', space=vmem, size = 0x12000, scoped, tag = 'internal scratch']
  #allocation2 [shape = 'f32[1,1]{1,0:T(1,128)S(1)}', space=vmem, size = 0x200, scoped, tag = 'scoped memory for tpu_custom_call.1']
  %s0 = inlined_call_operand.vmem [shape: f32[8,4], index: 0, kind: input, shape index: {}]
  %s1 = inlined_call_operand.vmem [shape: f32[4,128], index: 1, kind: input, shape index: {}]
  %s2 = inlined_call_operand.vmem [shape: f32[1,128], index: 2, kind: input, shape index: {}]
  %s3 = inlined_call_operand.hbm [shape: f32[128,128], index: 3, kind: input, shape index: {}]
  %s4 = inlined_call_operand.vmem [shape: f32[1,128], index: 4, kind: input, shape index: {}]
  %s5 = inlined_call_operand.hbm [shape: f32[128,128], index: 5, kind: input, shape index: {}]
  %s6 = inlined_call_operand.vmem [shape: f32[1,128], index: 6, kind: input, shape index: {}]
  %s7 = inlined_call_operand.vmem [shape: f32[1,128], index: 7, kind: input, shape index: {}]
  %s8 = inlined_call_operand.<no memory space> [shape: f32[1,1], index: 8, kind: input, shape index: {}]
  %s9 = inlined_call_operand.vmem [shape: f32[8,4], index: 9, kind: output, shape index: {0}]
  %s10 = inlined_call_operand.vmem [shape: f32[8,1], index: 10, kind: output, shape index: {1}]
  %11 = xla_tuple %s9, %s10
  %s12 = sld [smem:[#allocation0]]
  $region62: #{tpu_custom_call.1} parent=0
    _
  %s14 = ssub.s32 1, %s12
  %s15 = scalar_select 0, %s14, %s12
  %v16 = vstv %s8
  %17 = vst [vmem:[#allocation2] sm:$0x1] %v16
  $region1: #{tpu_custom_call.1} parent=0
    #allocation3 [shape = 'u8[65536]{0}', space=vmem, size = 0x10000, scoped, tag = 'input window, operand 3, single buffered']
    #allocation4 [shape = 's32[1]{0}', space=sflag, size = 0x4, scoped, tag = 'scoped memory for tpu_custom_call.1']
    #allocation5 [shape = 'u8[65536]{0}', space=vmem, size = 0x10000, scoped, tag = 'input window, operand 5, single buffered']
    #allocation6 [shape = 's32[1]{0}', space=sflag, size = 0x4, scoped, tag = 'scoped memory for tpu_custom_call.1']
    %18 = vsyncpa [#allocation4], 0
    %19 = vsyncpa [#allocation6], 0
    // Predicated region
    $region2: #{tpu_custom_call.1} parent=1 // pred_check
      _
    $region3: #{tpu_custom_call.1} parent=1 // pred_check_branch
      %21 = sbr.rel (0) target = $region5
    $region4: #{tpu_custom_call.1} parent=1 // pred_region
      _
    $region5: #{tpu_custom_call.1} parent=1 // pred_fallthru
      _
    // Predicated region
    $region6: #{tpu_custom_call.1} parent=1 // pred_check
      _
    $region7: #{tpu_custom_call.1} parent=1 // pred_check_branch
      %23 = sbr.rel (0) target = $region9
    $region8: #{tpu_custom_call.1} parent=1 // pred_region
      _
    $region9: #{tpu_custom_call.1} parent=1 // pred_fallthru
      _
    // Predicated region
    $region10: #{tpu_custom_call.1} parent=1 // pred_check
      _
    $region11: #{tpu_custom_call.1} parent=1 // pred_check_branch
      %25 = sbr.rel (0) target = $region13
    $region12: #{tpu_custom_call.1} parent=1 // pred_region
      _
    $region13: #{tpu_custom_call.1} parent=1 // pred_fallthru
      _
    // Predicated region
    $region14: #{tpu_custom_call.1} parent=1 // pred_check
      _
    $region15: #{tpu_custom_call.1} parent=1 // pred_check_branch
      %27 = sbr.rel (0) target = $region17
    $region16: #{tpu_custom_call.1} parent=1 // pred_region
      %s29 = ssub.s32 2048, 2048
      %30 = vsyncadd [#allocation4], %s29
      %s31 = sshll.u32 [#allocation3], 4
      %s32 = int_to_ptr.vmem [resolvable:$true] %s31
      %37 = dma.hbm_to_vmem [thread:$0]  %s3, 2048, %s32, [#allocation4], 128, 128, 8
    $region17: #{tpu_custom_call.1} parent=1 // pred_fallthru
      _
    // Predicated region
    $region18: #{tpu_custom_call.1} parent=1 // pred_check
      _
    $region19: #{tpu_custom_call.1} parent=1 // pred_check_branch
      %39 = sbr.rel (0) target = $region21
    $region20: #{tpu_custom_call.1} parent=1 // pred_region
      _
    $region21: #{tpu_custom_call.1} parent=1 // pred_fallthru
      _
    // Predicated region
    $region22: #{tpu_custom_call.1} parent=1 // pred_check
      _
    $region23: #{tpu_custom_call.1} parent=1 // pred_check_branch
      %41 = sbr.rel (0) target = $region25
    $region24: #{tpu_custom_call.1} parent=1 // pred_region
      %s43 = ssub.s32 2048, 2048
      %44 = vsyncadd [#allocation6], %s43
      %s45 = sshll.u32 [#allocation5], 4
      %s46 = int_to_ptr.vmem [resolvable:$true] %s45
      %51 = dma.hbm_to_vmem [thread:$0]  %s5, 2048, %s46, [#allocation6], 128, 128, 8
    $region25: #{tpu_custom_call.1} parent=1 // pred_fallthru
      _
    // Predicated region
    $region26: #{tpu_custom_call.1} parent=1 // pred_check
      _
    $region27: #{tpu_custom_call.1} parent=1 // pred_check_branch
      %53 = sbr.rel (0) target = $region29
    $region28: #{tpu_custom_call.1} parent=1 // pred_region
      _
    $region29: #{tpu_custom_call.1} parent=1 // pred_fallthru
      _
    // Predicated region
    $region30: #{tpu_custom_call.1} parent=1 // pred_check
      _
    $region31: #{tpu_custom_call.1} parent=1 // pred_check_branch
      %55 = sbr.rel (0) target = $region33
    $region32: #{tpu_custom_call.1} parent=1 // pred_region
      _
    $region33: #{tpu_custom_call.1} parent=1 // pred_fallthru
      _
    // Predicated region
    $region34: #{tpu_custom_call.1} parent=1 // pred_check
      _
    $region35: #{tpu_custom_call.1} parent=1 // pred_check_branch
      %57 = sbr.rel (0) target = $region37
    $region36: #{tpu_custom_call.1} parent=1 // pred_region
      _
    $region37: #{tpu_custom_call.1} parent=1 // pred_fallthru
      _
    // Predicated region
    $region38: #{tpu_custom_call.1} parent=1 // pred_check
      _
    $region39: #{tpu_custom_call.1} parent=1 // pred_check_branch
      %59 = sbr.rel (0) target = $region41
    $region40: #{tpu_custom_call.1} parent=1 // pred_region
      %60 = dma.done [#allocation4], 2048
    $region41: #{tpu_custom_call.1} parent=1 // pred_fallthru
      _
    // Predicated region
    $region42: #{tpu_custom_call.1} parent=1 // pred_check
      _
    $region43: #{tpu_custom_call.1} parent=1 // pred_check_branch
      %62 = sbr.rel (0) target = $region45
    $region44: #{tpu_custom_call.1} parent=1 // pred_region
      %63 = dma.done [#allocation6], 2048
    $region45: #{tpu_custom_call.1} parent=1 // pred_fallthru
      _
    %v64 = vld [vmem:[%s0] sm:$0xff]
    %v65 = vld [vmem:[%s1] sm:$0xf]
    %v66 = vld [vmem:[%s2] sm:$0x1]
    %68 = vset.pattern.permute.xlu0 0
    %69 = vperm.xlu0 %68, %v64
    %v70 = vpop.permute.xlu0 %69
    %v72 = vlaneseq
    %v73 = vshrl.u32 %v72, 7
    %v74 = vsub.s32 0, %v73
    %v75 = vrot.slane %v65, %v74
    %v76 = vmul.f32 %v70, %v75
    %v78 = vlaneseq
    %v79 = vshrl.u32 %v78, 7
    %v80 = vsub.s32 0, %v79
    %v81 = vrot.slane %v66, %v80
    %v83 = vadd.f32 %v81, %v76
    %84 = vset.pattern.permute.xlu0 1
    %85 = vperm.xlu0 %84, %v64
    %v86 = vpop.permute.xlu0 %85
    %v88 = vlaneseq
    %v89 = vshrl.u32 %v88, 7
    %v90 = vsub.s32 1, %v89
    %v91 = vrot.slane %v65, %v90
    %v92 = vmul.f32 %v86, %v91
    %v93 = vadd.f32 %v83, %v92
    %94 = vset.pattern.permute.xlu0 2
    %95 = vperm.xlu0 %94, %v64
    %v96 = vpop.permute.xlu0 %95
    %v98 = vlaneseq
    %v99 = vshrl.u32 %v98, 7
    %v100 = vsub.s32 2, %v99
    %v101 = vrot.slane %v65, %v100
    %v102 = vmul.f32 %v96, %v101
    %v103 = vadd.f32 %v93, %v102
    %104 = vset.pattern.permute.xlu0 3
    %105 = vperm.xlu0 %104, %v64
    %v106 = vpop.permute.xlu0 %105
    %v108 = vlaneseq
    %v109 = vshrl.u32 %v108, 7
    %v110 = vsub.s32 3, %v109
    %v111 = vrot.slane %v65, %v110
    %v112 = vmul.f32 %v106, %v111
    %v113 = vadd.f32 %v103, %v112
    %v114 = vmax.f32 %v113, 0.0
    %v115 = vld [vmem:[#allocation3] sm:$0xff]
    %v116 = vld [vmem:[#allocation3 + $0x8] sm:$0xff]
    %v117 = vld [vmem:[#allocation3 + $0x10] sm:$0xff]
    %v118 = vld [vmem:[#allocation3 + $0x18] sm:$0xff]
    %v119 = vld [vmem:[#allocation3 + $0x20] sm:$0xff]
    %v120 = vld [vmem:[#allocation3 + $0x28] sm:$0xff]
    %v121 = vld [vmem:[#allocation3 + $0x30] sm:$0xff]
    %v122 = vld [vmem:[#allocation3 + $0x38] sm:$0xff]
    %v123 = vld [vmem:[#allocation3 + $0x40] sm:$0xff]
    %v124 = vld [vmem:[#allocation3 + $0x48] sm:$0xff]
    %v125 = vld [vmem:[#allocation3 + $0x50] sm:$0xff]
    %v126 = vld [vmem:[#allocation3 + $0x58] sm:$0xff]
    %v127 = vld [vmem:[#allocation3 + $0x60] sm:$0xff]
    %v128 = vld [vmem:[#allocation3 + $0x68] sm:$0xff]
    %v129 = vld [vmem:[#allocation3 + $0x70] sm:$0xff]
    %v130 = vld [vmem:[#allocation3 + $0x78] sm:$0xff]
    %v131 = vld [vmem:[%s4] sm:$0x1]
    %v133 = vlaneseq
    %v134 = vshrl.u32 %v133, 7
    %v135 = vsub.s32 0, %v134
    %v136 = vrot.slane %v131, %v135
    %138 = vmatprep.subr.mxu0 0.0
    %139 = vmatpush1.msra.mxu0 %v130
    %140 = vmatprep.subr.mxu0 0.0
    %141 = vmatpush1.msra.mxu0 %v129
    %142 = vmatprep.subr.mxu0 0.0
    %143 = vmatpush1.msra.mxu0 %v128
    %144 = vmatprep.subr.mxu0 0.0
    %145 = vmatpush1.msra.mxu0 %v127
    %146 = vmatprep.subr.mxu0 0.0
    %147 = vmatpush1.msra.mxu0 %v126
    %148 = vmatprep.subr.mxu0 0.0
    %149 = vmatpush1.msra.mxu0 %v125
    %150 = vmatprep.subr.mxu0 0.0
    %151 = vmatpush1.msra.mxu0 %v124
    %152 = vmatprep.subr.mxu0 0.0
    %153 = vmatpush1.msra.mxu0 %v123
    %154 = vmatprep.subr.mxu0 0.0
    %155 = vmatpush1.msra.mxu0 %v122
    %156 = vmatprep.subr.mxu0 0.0
    %157 = vmatpush1.msra.mxu0 %v121
    %158 = vmatprep.subr.mxu0 0.0
    %159 = vmatpush1.msra.mxu0 %v120
    %160 = vmatprep.subr.mxu0 0.0
    %161 = vmatpush1.msra.mxu0 %v119
    %162 = vmatprep.subr.mxu0 0.0
    %163 = vmatpush1.msra.mxu0 %v118
    %164 = vmatprep.subr.mxu0 0.0
    %165 = vmatpush1.msra.mxu0 %v117
    %166 = vmatprep.subr.mxu0 0.0
    %167 = vmatpush1.msra.mxu0 %v116
    %168 = vmatprep.subr.mxu0 0.0
    %169 = vmatpush1.msra.mxu0 %v115
    %170 = vmatprep.subr.mxu0 0.0
    %171 = vmatpush2.msra.mxu0 0.0
    %172 = vmatprep.subr.mxu0 0.0
    %173 = vmatpush2.msra.mxu0 0.0
    %174 = vmatprep.subr.mxu0 0.0
    %175 = vmatpush2.msra.mxu0 0.0
    %176 = vmatprep.subr.mxu0 0.0
    %177 = vmatpush2.msra.mxu0 0.0
    %178 = vmatprep.subr.mxu0 0.0
    %179 = vmatpush2.msra.mxu0 0.0
    %180 = vmatprep.subr.mxu0 0.0
    %181 = vmatpush2.msra.mxu0 0.0
    %182 = vmatprep.subr.mxu0 0.0
    %183 = vmatpush2.msra.mxu0 0.0
    %184 = vmatprep.subr.mxu0 0.0
    %185 = vmatpush2.msra.mxu0 0.0
    %186 = vmatprep.subr.mxu0 0.0
    %187 = vmatpush2.msra.mxu0 0.0
    %188 = vmatprep.subr.mxu0 0.0
    %189 = vmatpush2.msra.mxu0 0.0
    %190 = vmatprep.subr.mxu0 0.0
    %191 = vmatpush2.msra.mxu0 0.0
    %192 = vmatprep.subr.mxu0 0.0
    %193 = vmatpush2.msra.mxu0 0.0
    %194 = vmatprep.subr.mxu0 0.0
    %195 = vmatpush2.msra.mxu0 0.0
    %196 = vmatprep.subr.mxu0 0.0
    %197 = vmatpush2.msra.mxu0 0.0
    %198 = vmatprep.subr.mxu0 0.0
    %199 = vmatpush2.msra.mxu0 0.0
    %200 = vmatprep.subr.mxu0 0.0
    %201 = vmatpush2.msra.mxu0 0.0
    %202 = vmatprep.mubr.f32.mxu0 0.0
    %203 = vmatmul.mubr.f32.gmra.mxu0 %v114
    %v204 = vpop.f32.mrf.mxu0
    %v205 = vadd.f32 %v136, %v204
    %v206 = vpop.f32.mrf.mxu0
    %207 = vdwg.mxu0
    %v208 = vmax.f32 %v205, 0.0
    %v209 = vld [vmem:[#allocation5] sm:$0xff]
    %v210 = vld [vmem:[#allocation5 + $0x8] sm:$0xff]
    %v211 = vld [vmem:[#allocation5 + $0x10] sm:$0xff]
    %v212 = vld [vmem:[#allocation5 + $0x18] sm:$0xff]
    %v213 = vld [vmem:[#allocation5 + $0x20] sm:$0xff]
    %v214 = vld [vmem:[#allocation5 + $0x28] sm:$0xff]
    %v215 = vld [vmem:[#allocation5 + $0x30] sm:$0xff]
    %v216 = vld [vmem:[#allocation5 + $0x38] sm:$0xff]
    %v217 = vld [vmem:[#allocation5 + $0x40] sm:$0xff]
    %v218 = vld [vmem:[#allocation5 + $0x48] sm:$0xff]
    %v219 = vld [vmem:[#allocation5 + $0x50] sm:$0xff]
    %v220 = vld [vmem:[#allocation5 + $0x58] sm:$0xff]
    %v221 = vld [vmem:[#allocation5 + $0x60] sm:$0xff]
    %v222 = vld [vmem:[#allocation5 + $0x68] sm:$0xff]
    %v223 = vld [vmem:[#allocation5 + $0x70] sm:$0xff]
    %v224 = vld [vmem:[#allocation5 + $0x78] sm:$0xff]
    %v225 = vld [vmem:[%s6] sm:$0x1]
    %v227 = vlaneseq
    %v228 = vshrl.u32 %v227, 7
    %v229 = vsub.s32 0, %v228
    %v230 = vrot.slane %v225, %v229
    %232 = vmatprep.subr.mxu0 0.0
    %233 = vmatpush1.msra.mxu0 %v224
    %234 = vmatprep.subr.mxu0 0.0
    %235 = vmatpush1.msra.mxu0 %v223
    %236 = vmatprep.subr.mxu0 0.0
    %237 = vmatpush1.msra.mxu0 %v222
    %238 = vmatprep.subr.mxu0 0.0
    %239 = vmatpush1.msra.mxu0 %v221
    %240 = vmatprep.subr.mxu0 0.0
    %241 = vmatpush1.msra.mxu0 %v220
    %242 = vmatprep.subr.mxu0 0.0
    %243 = vmatpush1.msra.mxu0 %v219
    %244 = vmatprep.subr.mxu0 0.0
    %245 = vmatpush1.msra.mxu0 %v218
    %246 = vmatprep.subr.mxu0 0.0
    %247 = vmatpush1.msra.mxu0 %v217
    %248 = vmatprep.subr.mxu0 0.0
    %249 = vmatpush1.msra.mxu0 %v216
    %250 = vmatprep.subr.mxu0 0.0
    %251 = vmatpush1.msra.mxu0 %v215
    %252 = vmatprep.subr.mxu0 0.0
    %253 = vmatpush1.msra.mxu0 %v214
    %254 = vmatprep.subr.mxu0 0.0
    %255 = vmatpush1.msra.mxu0 %v213
    %256 = vmatprep.subr.mxu0 0.0
    %257 = vmatpush1.msra.mxu0 %v212
    %258 = vmatprep.subr.mxu0 0.0
    %259 = vmatpush1.msra.mxu0 %v211
    %260 = vmatprep.subr.mxu0 0.0
    %261 = vmatpush1.msra.mxu0 %v210
    %262 = vmatprep.subr.mxu0 0.0
    %263 = vmatpush1.msra.mxu0 %v209
    %264 = vmatprep.subr.mxu0 0.0
    %265 = vmatpush2.msra.mxu0 0.0
    %266 = vmatprep.subr.mxu0 0.0
    %267 = vmatpush2.msra.mxu0 0.0
    %268 = vmatprep.subr.mxu0 0.0
    %269 = vmatpush2.msra.mxu0 0.0
    %270 = vmatprep.subr.mxu0 0.0
    %271 = vmatpush2.msra.mxu0 0.0
    %272 = vmatprep.subr.mxu0 0.0
    %273 = vmatpush2.msra.mxu0 0.0
    %274 = vmatprep.subr.mxu0 0.0
    %275 = vmatpush2.msra.mxu0 0.0
    %276 = vmatprep.subr.mxu0 0.0
    %277 = vmatpush2.msra.mxu0 0.0
    %278 = vmatprep.subr.mxu0 0.0
    %279 = vmatpush2.msra.mxu0 0.0
    %280 = vmatprep.subr.mxu0 0.0
    %281 = vmatpush2.msra.mxu0 0.0
    %282 = vmatprep.subr.mxu0 0.0
    %283 = vmatpush2.msra.mxu0 0.0
    %284 = vmatprep.subr.mxu0 0.0
    %285 = vmatpush2.msra.mxu0 0.0
    %286 = vmatprep.subr.mxu0 0.0
    %287 = vmatpush2.msra.mxu0 0.0
    %288 = vmatprep.subr.mxu0 0.0
    %289 = vmatpush2.msra.mxu0 0.0
    %290 = vmatprep.subr.mxu0 0.0
    %291 = vmatpush2.msra.mxu0 0.0
    %292 = vmatprep.subr.mxu0 0.0
    %293 = vmatpush2.msra.mxu0 0.0
    %294 = vmatprep.subr.mxu0 0.0
    %295 = vmatpush2.msra.mxu0 0.0
    %296 = vmatprep.mubr.f32.mxu0 0.0
    %297 = vmatmul.mubr.f32.gmra.mxu0 %v208
    %v298 = vpop.f32.mrf.mxu0
    %v299 = vadd.f32 %v230, %v298
    %v300 = vpop.f32.mrf.mxu0
    %301 = vdwg.mxu0
    %302 = vmax.xlane.f32.xlu0 %v299
    %v303 = vpop.xlane.xlu0 %302
    %v304 = vsub.f32 %v299, %v303
    %v305 = vmul.f32 %v304, 1.442695
    %v306 = vpow.pop %v305
    %307 = vadd.xlane.f32.xlu0 %v306
    %v308 = vpop.xlane.xlu0 %307
    %v309 = vrcp.pop %v308
    %v310 = vmul.f32 %v308, %v309
    %v311 = vsub.f32 2.0, %v310
    %v312 = vmul.f32 %v309, %v311
    %v313 = vmul.f32 %v306, %v312
    %vm314 = vcmask 31744
    %315 = vst.msk [vmem:[%s9] sm:$0xff] %vm314, %v313
    %v316 = vld [vmem:[%s7] sm:$0x1]
    %v318 = vlaneseq
    %v319 = vshrl.u32 %v318, 7
    %v320 = vsub.s32 0, %v319
    %v321 = vrot.slane %v316, %v320
    %v323 = vmul.f32 %v208, %v321
    %324 = vadd.xlane.f32.xlu0 %v323
    %v325 = vpop.xlane.xlu0 %324
    %v326 = vld [vmem:[#allocation2] sm:$0x1]
    %v328 = vlaneseq
    %v329 = vshrl.u32 %v328, 7
    %v330 = vsub.s32 0, %v329
    %v331 = vrot.slane %v326, %v330
    %v333 = vadd.f32 %v325, %v331
    %vm334 = vcmask 7168
    %335 = vst.msk [vmem:[%s10] sm:$0xff] %vm334, %v333
    // Predicated region
    $region46: #{tpu_custom_call.1} parent=1 // pred_check
      _
    $region47: #{tpu_custom_call.1} parent=1 // pred_check_branch
      %337 = sbr.rel (0) target = $region49
    $region48: #{tpu_custom_call.1} parent=1 // pred_region
      _
    $region49: #{tpu_custom_call.1} parent=1 // pred_fallthru
      _
    // Predicated region
    $region50: #{tpu_custom_call.1} parent=1 // pred_check
      _
    $region51: #{tpu_custom_call.1} parent=1 // pred_check_branch
      %339 = sbr.rel (0) target = $region53
    $region52: #{tpu_custom_call.1} parent=1 // pred_region
      _
    $region53: #{tpu_custom_call.1} parent=1 // pred_fallthru
      _
    // Predicated region
    $region54: #{tpu_custom_call.1} parent=1 // pred_check
      _
    $region55: #{tpu_custom_call.1} parent=1 // pred_check_branch
      %341 = sbr.rel (0) target = $region57
    $region56: #{tpu_custom_call.1} parent=1 // pred_region
      _
    $region57: #{tpu_custom_call.1} parent=1 // pred_fallthru
      _
    // Predicated region
    $region58: #{tpu_custom_call.1} parent=1 // pred_check
      _
    $region59: #{tpu_custom_call.1} parent=1 // pred_check_branch
      %343 = sbr.rel (0) target = $region61
    $region60: #{tpu_custom_call.1} parent=1 // pred_region
      _
    $region61: #{tpu_custom_call.1} parent=1 // pred_fallthru
      _
    %344 = vsyncpa [#allocation4], 1
    %345 = vsyncpa [#allocation6], 1

</llo_original>
